<compile_context>
chip_gen: v6e
topology: v6e:2x2x1
jax: 0.10.0
libtpu: 0.0.40
codegen_flags: <defaults>
</compile_context>

<pallas_src>
import jax
import jax.numpy as jnp
from jax.experimental import pallas as pl
from jax.experimental.pallas import tpu as pltpu

_LANE = 128


def _round_up(x, m):
    return (x + m - 1) // m * m


# --------------------------------------------------------------------------
# Kernel (batch-on-lanes layout: every activation is [features, batch_tile])
# --------------------------------------------------------------------------
def coupling_fwd_kernel(xT_ref, maskT_ref, w1t_ref, w2t_ref, w3t_ref,
                        b12_ref, b3_ref, zT_ref, logdetT_ref):
    D = xT_ref.shape[0]

    xT = xT_ref[...]                    # [D, TB]   f32
    maskT = maskT_ref[...]              # [D, 1]    f32 (broadcasts over lanes)
    inv_maskT = 1.0 - maskT

    b1 = b12_ref[:, 0:1]                # [Hp, 1]
    b2 = b12_ref[:, 1:2]                # [Hp, 1]

    # Fused layer 1: mask is pre-folded into W1^T, so feed x^T directly.
    # (K = D is tiny; keep f32 operands for precision.)
    h = jnp.dot(w1t_ref[...], xT, preferred_element_type=jnp.float32) + b1
    h = jnp.maximum(h, 0.0)

    # Fused layer 2 (block-diagonal s/t), bf16 operands / f32 MXU accumulation.
    h = jnp.dot(w2t_ref[...], h.astype(jnp.bfloat16),
                preferred_element_type=jnp.float32) + b2
    h = jnp.maximum(h, 0.0)

    # Fused layer 3 -> stacked [ s ; t ] along the sublane axis.
    st = jnp.dot(w3t_ref[...], h.astype(jnp.bfloat16),
                 preferred_element_type=jnp.float32) + b3_ref[...]
    sT = st[0:D, :]                     # [D, TB]
    tT = st[D:2 * D, :]                 # [D, TB]

    # z = x*mask + (1 - mask) * (x*exp(s) + t)   (lane-dense elementwise tail)
    zT = xT * maskT + inv_maskT * (xT * jnp.exp(sT) + tT)
    zT_ref[...] = zT.astype(zT_ref.dtype)

    # logdet = sum_j (1 - mask_j) * s_j  ->  [1, TB]  (lane-dense store)
    logdetT_ref[...] = jnp.sum(inv_maskT * sT, axis=0,
                               keepdims=True).astype(logdetT_ref.dtype)


# --------------------------------------------------------------------------
# Parameter fusion (done once, outside the kernel)
# --------------------------------------------------------------------------
def fuse_coupling_params(params, mask, input_dim):
    """Fuse the s-/t-MLP weights into one padded, transposed parameter set."""
    D = input_dim
    H = params["s_w1"].shape[1]
    Hp = _round_up(2 * H, _LANE)             # fused + padded hidden width
    mask = mask.astype(jnp.float32).reshape(D)

    # Layer 1, with the mask folded into the rows of W1 (exact transform).
    w1 = jnp.zeros((D, Hp), jnp.float32)
    w1 = w1.at[:, :H].set(params["s_w1"]).at[:, H:2 * H].set(params["t_w1"])
    w1 = w1 * mask.reshape(D, 1)
    w1t = jnp.asarray(w1.T)                  # f32  [Hp, D]

    # Layer 2: block-diagonal (s-block / t-block).
    w2 = jnp.zeros((Hp, Hp), jnp.float32)
    w2 = w2.at[:H, :H].set(params["s_w2"]).at[H:2 * H, H:2 * H].set(params["t_w2"])
    w2t = w2.T.astype(jnp.bfloat16)          # bf16 [Hp, Hp]

    # Layer 3: produces [ s | t ] -> transposed to stack s above t.
    w3 = jnp.zeros((Hp, 2 * D), jnp.float32)
    w3 = w3.at[:H, :D].set(params["s_w3"]).at[H:2 * H, D:].set(params["t_w3"])
    w3t = w3.T.astype(jnp.bfloat16)          # bf16 [2D, Hp]

    # Biases as column vectors: [b1 | b2] packed, b3 kept separate (no 2D<=Hp
    # assumption).
    b12 = jnp.zeros((Hp, 2), jnp.float32)
    b12 = b12.at[:H, 0].set(params["s_b1"]).at[H:2 * H, 0].set(params["t_b1"])
    b12 = b12.at[:H, 1].set(params["s_b2"]).at[H:2 * H, 1].set(params["t_b2"])
    b3 = jnp.concatenate([params["s_b3"], params["t_b3"]]).reshape(2 * D, 1)

    return {
        "w1t": w1t, "w2t": w2t, "w3t": w3t,
        "b12": b12, "b3": b3,
        "maskT": mask.reshape(D, 1),
    }


# --------------------------------------------------------------------------
# Wrapper
# --------------------------------------------------------------------------
def coupling_layer_forward(x, fused, *, block_b=4096):
    """x: [B, D] f32; fused: output of fuse_coupling_params. Returns (z, logdet)."""
    B, D = x.shape
    Hp = fused["w1t"].shape[0]

    # Batch tile on the lane axis -> must be a multiple of 128 (or full array).
    block_b = max(_LANE, _round_up(block_b, _LANE))
    tb = min(block_b, _round_up(B, _LANE))
    bp = _round_up(B, tb)
    # Keep >= 2 grid steps when the batch allows it, so the 'parallel' axis can
    # shard across both TensorCores on v7x.
    if bp // tb < 2 and B > _LANE:
        tb = _round_up(-(-B // 2), _LANE)
        bp = _round_up(B, tb)

    # Single wrapper-side transpose + zero-pad to [D, bp].
    xT = jnp.zeros((D, bp), jnp.float32).at[:, :B].set(
        x.astype(jnp.float32).T)

    const = lambda i: (0, 0)
    flops = 2 * bp * (D * Hp + Hp * Hp + Hp * 2 * D)
    bytes_accessed = (xT.size * 4 + bp * D * 4 + bp * 4
                      + fused["w1t"].size * 4 + fused["w2t"].size * 2
                      + fused["w3t"].size * 2 + fused["b12"].size * 4
                      + fused["b3"].size * 4)

    zT, logdetT = pl.pallas_call(
        coupling_fwd_kernel,
        out_shape=(
            jax.ShapeDtypeStruct((D, bp), jnp.float32),
            jax.ShapeDtypeStruct((1, bp), jnp.float32),
        ),
        grid=(bp // tb,),
        in_specs=[
            pl.BlockSpec((D, tb), lambda i: (0, i)),   # x^T      (pipelined)
            pl.BlockSpec((D, 1), const),               # mask col (resident)
            pl.BlockSpec((Hp, D), const),              # W1^T (mask folded)
            pl.BlockSpec((Hp, Hp), const),             # W2^T
            pl.BlockSpec((2 * D, Hp), const),          # W3^T
            pl.BlockSpec((Hp, 2), const),              # [b1 | b2]
            pl.BlockSpec((2 * D, 1), const),           # b3
        ],
        out_specs=(
            pl.BlockSpec((D, tb), lambda i: (0, i)),   # z^T      (lane-dense)
            pl.BlockSpec((1, tb), lambda i: (0, i)),   # logdet   (lane-dense)
        ),
        compiler_params=pltpu.CompilerParams(
            dimension_semantics=("parallel",),
            vmem_limit_bytes=48 * 1024 * 1024,
        ),
        cost_estimate=pl.CostEstimate(
            flops=flops, transcendentals=bp * D, bytes_accessed=bytes_accessed),
    )(xT, fused["maskT"], fused["w1t"], fused["w2t"], fused["w3t"],
      fused["b12"], fused["b3"])

    z = zT[:, :B].T                 # back to [B, D] (single wrapper transpose)
    logdet = logdetT[0, :B]
    return z, logdet


# --------------------------------------------------------------------------
# Init + references
# --------------------------------------------------------------------------
def init_params(key, input_dim, hidden_dim):
    """PyTorch-nn.Linear-style uniform(+-1/sqrt(fan_in)) init; weights stored
    transposed vs nn.Linear, i.e. [in_dim, out_dim]."""
    params = {}
    shapes = {"1": (input_dim, hidden_dim),
              "2": (hidden_dim, hidden_dim),
              "3": (hidden_dim, input_dim)}
    for prefix in ("s", "t"):
        for idx, (fan_in, fan_out) in shapes.items():
            key, kw, kb = jax.random.split(key, 3)
            bound = 1.0 / jnp.sqrt(fan_in)
            params[f"{prefix}_w{idx}"] = jax.random.uniform(
                kw, (fan_in, fan_out), jnp.float32, -bound, bound)
            params[f"{prefix}_b{idx}"] = jax.random.uniform(
                kb, (fan_out,), jnp.float32, -bound, bound)
    return params


def _mlp_f32(xm, w1, b1, w2, b2, w3, b3):
    h = jnp.maximum(xm @ w1 + b1, 0.0)
    h = jnp.maximum(h @ w2 + b2, 0.0)
    return h @ w3 + b3


def _mlp_mixed(xm, w1, b1, w2, b2, w3, b3):
    """Mirrors the kernel precision: layer 1 in f32, layers 2/3 with bf16
    operands and f32 accumulation."""
    h = jnp.maximum(jnp.dot(xm, w1, preferred_element_type=jnp.float32) + b1, 0.0)
    h = jnp.maximum(
        jnp.dot(h.astype(jnp.bfloat16), w2.astype(jnp.bfloat16),
                preferred_element_type=jnp.float32) + b2, 0.0)
    return jnp.dot(h.astype(jnp.bfloat16), w3.astype(jnp.bfloat16),
                   preferred_element_type=jnp.float32) + b3


def reference_forward(x, mask, params, mlp=_mlp_f32):
    xm = x * mask
    s = mlp(xm, params["s_w1"], params["s_b1"], params["s_w2"],
            params["s_b2"], params["s_w3"], params["s_b3"])
    t = mlp(xm, params["t_w1"], params["t_b1"], params["t_w2"],
            params["t_b2"], params["t_w3"], params["t_b3"])
    z = x * mask + (1.0 - mask) * (x * jnp.exp(s) + t)
    logdet = jnp.sum((1.0 - mask) * s, axis=1)
    return z, logdet


# --------------------------------------------------------------------------
# Self-test
# --------------------------------------------------------------------------
if __name__ == "__main__":
    batch = 8
    input_dim = 4
    hidden_dim = 32

    key = jax.random.PRNGKey(0)
    key, kx = jax.random.split(key)
    x = jax.random.normal(kx, (batch, input_dim), jnp.float32)
    mask = (jnp.arange(input_dim) % 2).astype(jnp.float32)   # checkerboard mask

    params = init_params(key, input_dim, hidden_dim)
    fused = fuse_coupling_params(params, mask, input_dim)

    # --- small batch: single padded grid step ---
    z, logdet = coupling_layer_forward(x, fused)
    jax.block_until_ready((z, logdet))
    assert z.shape == (batch, input_dim)
    assert logdet.shape == (batch,)

    z_mix, ld_mix = reference_forward(x, mask, params, mlp=_mlp_mixed)
    assert jnp.allclose(z, z_mix, atol=5e-3, rtol=5e-3)
    assert jnp.allclose(logdet, ld_mix, atol=5e-3, rtol=5e-3)

    # loose f32 sanity check (bf16 operands in layers 2/3 => loosened tolerance)
    z_f32, ld_f32 = reference_forward(x, mask, params, mlp=_mlp_f32)
    assert jnp.allclose(z, z_f32, atol=1e-1, rtol=1e-1)
    assert jnp.allclose(logdet, ld_f32, atol=1e-1, rtol=1e-1)

    # --- larger batch: exercises multi-step batch grid, padding, pipelining ---
    batch2 = 300
    key, kx2 = jax.random.split(key)
    x2 = jax.random.normal(kx2, (batch2, input_dim), jnp.float32)
    z2_ref, ld2_ref = reference_forward(x2, mask, params, mlp=_mlp_mixed)

    # explicit small tile -> 3 grid steps
    z2, logdet2 = coupling_layer_forward(x2, fused, block_b=128)
    jax.block_until_ready((z2, logdet2))
    assert z2.shape == (batch2, input_dim)
    assert logdet2.shape == (batch2,)
    assert jnp.allclose(z2, z2_ref, atol=5e-3, rtol=5e-3)
    assert jnp.allclose(logdet2, ld2_ref, atol=5e-3, rtol=5e-3)

    # default tile -> exercises the ">= 2 grid steps" (megacore) clamp
    z3, logdet3 = coupling_layer_forward(x2, fused)
    jax.block_until_ready((z3, logdet3))
    assert jnp.allclose(z3, z2_ref, atol=5e-3, rtol=5e-3)
    assert jnp.allclose(logdet3, ld2_ref, atol=5e-3, rtol=5e-3)

    print("KERNEL_OK")
</pallas_src>

<mosaic_0001>
module attributes {stable_mosaic.version = 11 : i64} {
  func.func @coupling_fwd_kernel(%arg0: i32, %arg1: memref<4x128xf32, #tpu.memory_space<vmem>>, %arg2: memref<4x1xf32, #tpu.memory_space<vmem>>, %arg3: memref<128x4xf32, #tpu.memory_space<vmem>>, %arg4: memref<128x128xbf16, #tpu.memory_space<vmem>>, %arg5: memref<8x128xbf16, #tpu.memory_space<vmem>>, %arg6: memref<128x2xf32, #tpu.memory_space<vmem>>, %arg7: memref<8x1xf32, #tpu.memory_space<vmem>>, %arg8: memref<4x128xf32, #tpu.memory_space<vmem>>, %arg9: memref<1x128xf32, #tpu.memory_space<vmem>>) attributes {dimension_semantics = [#tpu.dimension_semantics<parallel>], iteration_bounds = array<i64: 1>, scalar_prefetch = 0 : i64, scratch_operands = 0 : i64, tpu.core_type = #tpu.core_type<tc>, window_params = [{transform_indices = @transform_0, window_bounds = array<i64: 4, 128>}, {pipeline_mode = #tpu.pipeline_mode<synchronous>, transform_indices = @transform_1, window_bounds = array<i64: 4, 1>}, {pipeline_mode = #tpu.pipeline_mode<synchronous>, transform_indices = @transform_2, window_bounds = array<i64: 128, 4>}, {pipeline_mode = #tpu.pipeline_mode<synchronous>, transform_indices = @transform_3, window_bounds = array<i64: 128, 128>}, {pipeline_mode = #tpu.pipeline_mode<synchronous>, transform_indices = @transform_4, window_bounds = array<i64: 8, 128>}, {pipeline_mode = #tpu.pipeline_mode<synchronous>, transform_indices = @transform_5, window_bounds = array<i64: 128, 2>}, {pipeline_mode = #tpu.pipeline_mode<synchronous>, transform_indices = @transform_6, window_bounds = array<i64: 8, 1>}, {transform_indices = @transform_7, window_bounds = array<i64: 4, 128>}, {transform_indices = @transform_8, window_bounds = array<i64: 1, 128>}]} {
    %c0 = arith.constant 0 : index
    %c0_0 = arith.constant 0 : index
    %0 = vector.load %arg1[%c0, %c0_0] : memref<4x128xf32, #tpu.memory_space<vmem>>, vector<4x128xf32>
    %c0_1 = arith.constant 0 : index
    %c0_2 = arith.constant 0 : index
    %1 = vector.load %arg2[%c0_1, %c0_2] : memref<4x1xf32, #tpu.memory_space<vmem>>, vector<4x1xf32>
    %cst = arith.constant 1.000000e+00 : f32
    %2 = vector.broadcast %cst : f32 to vector<4x1xf32>
    %3 = arith.subf %2, %1 : vector<4x1xf32>
    %c0_3 = arith.constant 0 : index
    %c0_4 = arith.constant 0 : index
    %4 = vector.load %arg6[%c0_3, %c0_4] : memref<128x2xf32, #tpu.memory_space<vmem>>, vector<128x1xf32>
    %c0_5 = arith.constant 0 : index
    %c1 = arith.constant 1 : index
    %5 = vector.load %arg6[%c0_5, %c1] : memref<128x2xf32, #tpu.memory_space<vmem>>, vector<128x1xf32>
    %c0_6 = arith.constant 0 : index
    %c0_7 = arith.constant 0 : index
    %6 = vector.load %arg3[%c0_6, %c0_7] : memref<128x4xf32, #tpu.memory_space<vmem>>, vector<128x4xf32>
    %cst_8 = arith.constant dense<0.000000e+00> : vector<128x128xf32>
    %7 = tpu.matmul %6, %0, %cst_8 {dimension_numbers = #tpu.dot_dimension_numbers<[1], [0], [0], [1], [0, 0, 1, 1], [], []>} : vector<128x4xf32>, vector<4x128xf32>, vector<128x128xf32> -> vector<128x128xf32>
    %8 = vector.broadcast %4 : vector<128x1xf32> to vector<128x128xf32>
    %9 = arith.addf %7, %8 : vector<128x128xf32>
    %cst_9 = arith.constant 0.000000e+00 : f32
    %10 = vector.broadcast %cst_9 : f32 to vector<128x128xf32>
    %11 = arith.maximumf %9, %10 : vector<128x128xf32>
    %c0_10 = arith.constant 0 : index
    %c0_11 = arith.constant 0 : index
    %12 = vector.load %arg4[%c0_10, %c0_11] : memref<128x128xbf16, #tpu.memory_space<vmem>>, vector<128x128xbf16>
    %13 = arith.truncf %11 : vector<128x128xf32> to vector<128x128xbf16>
    %cst_12 = arith.constant dense<0.000000e+00> : vector<128x128xf32>
    %14 = tpu.matmul %12, %13, %cst_12 {dimension_numbers = #tpu.dot_dimension_numbers<[1], [0], [0], [1], [0, 0, 1, 1], [], []>} : vector<128x128xbf16>, vector<128x128xbf16>, vector<128x128xf32> -> vector<128x128xf32>
    %15 = vector.broadcast %5 : vector<128x1xf32> to vector<128x128xf32>
    %16 = arith.addf %14, %15 : vector<128x128xf32>
    %cst_13 = arith.constant 0.000000e+00 : f32
    %17 = vector.broadcast %cst_13 : f32 to vector<128x128xf32>
    %18 = arith.maximumf %16, %17 : vector<128x128xf32>
    %c0_14 = arith.constant 0 : index
    %c0_15 = arith.constant 0 : index
    %19 = vector.load %arg5[%c0_14, %c0_15] : memref<8x128xbf16, #tpu.memory_space<vmem>>, vector<8x128xbf16>
    %20 = arith.truncf %18 : vector<128x128xf32> to vector<128x128xbf16>
    %cst_16 = arith.constant dense<0.000000e+00> : vector<8x128xf32>
    %21 = tpu.matmul %19, %20, %cst_16 {dimension_numbers = #tpu.dot_dimension_numbers<[1], [0], [0], [1], [0, 0, 1, 1], [], []>} : vector<8x128xbf16>, vector<128x128xbf16>, vector<8x128xf32> -> vector<8x128xf32>
    %c0_17 = arith.constant 0 : index
    %c0_18 = arith.constant 0 : index
    %22 = vector.load %arg7[%c0_17, %c0_18] : memref<8x1xf32, #tpu.memory_space<vmem>>, vector<8x1xf32>
    %23 = vector.broadcast %22 : vector<8x1xf32> to vector<8x128xf32>
    %24 = arith.addf %21, %23 : vector<8x128xf32>
    %25 = vector.extract_strided_slice %24 {offsets = [0, 0], sizes = [4, 128], strides = [1, 1]} : vector<8x128xf32> to vector<4x128xf32>
    %26 = vector.extract_strided_slice %24 {offsets = [4, 0], sizes = [4, 128], strides = [1, 1]} : vector<8x128xf32> to vector<4x128xf32>
    %27 = vector.broadcast %1 : vector<4x1xf32> to vector<4x128xf32>
    %28 = arith.mulf %0, %27 : vector<4x128xf32>
    %29 = math.exp %25 : vector<4x128xf32>
    %30 = arith.mulf %0, %29 : vector<4x128xf32>
    %31 = arith.addf %30, %26 : vector<4x128xf32>
    %32 = vector.broadcast %3 : vector<4x1xf32> to vector<4x128xf32>
    %33 = arith.mulf %32, %31 : vector<4x128xf32>
    %34 = arith.addf %28, %33 : vector<4x128xf32>
    %c0_19 = arith.constant 0 : index
    %c0_20 = arith.constant 0 : index
    %35 = vector.load %arg8[%c0_19, %c0_20] : memref<4x128xf32, #tpu.memory_space<vmem>>, vector<4x128xf32>
    tpu.vector_store %arg8[%c0_19, %c0_20], %34 {strides = array<i32>} : memref<4x128xf32, #tpu.memory_space<vmem>>, vector<4x128xf32>,
    %36 = vector.broadcast %3 : vector<4x1xf32> to vector<4x128xf32>
    %37 = arith.mulf %36, %25 : vector<4x128xf32>
    %cst_21 = arith.constant dense<0.000000e+00> : vector<128xf32>
    %38 = vector.multi_reduction <add>, %37, %cst_21 [0] : vector<4x128xf32> to vector<128xf32>
    %39 = vector.shape_cast %38 : vector<128xf32> to vector<1x128xf32>
    %c0_22 = arith.constant 0 : index
    %c0_23 = arith.constant 0 : index
    %40 = vector.load %arg9[%c0_22, %c0_23] : memref<1x128xf32, #tpu.memory_space<vmem>>, vector<1x128xf32>
    tpu.vector_store %arg9[%c0_22, %c0_23], %39 {strides = array<i32>} : memref<1x128xf32, #tpu.memory_space<vmem>>, vector<1x128xf32>,
    return
  }
  func.func @transform_0(%arg0: i32) -> (i32, i32) {
    %c0_i32 = arith.constant 0 : i32
    %c0_i32_0 = arith.constant 0 : i32
    return %c0_i32, %arg0 : i32, i32
  }
  func.func @transform_1(%arg0: i32) -> (i32, i32) {
    %c0_i32 = arith.constant 0 : i32
    %c0_i32_0 = arith.constant 0 : i32
    %c0_i32_1 = arith.constant 0 : i32
    return %c0_i32, %c0_i32_0 : i32, i32
  }
  func.func @transform_2(%arg0: i32) -> (i32, i32) {
    %c0_i32 = arith.constant 0 : i32
    %c0_i32_0 = arith.constant 0 : i32
    %c0_i32_1 = arith.constant 0 : i32
    return %c0_i32, %c0_i32_0 : i32, i32
  }
  func.func @transform_3(%arg0: i32) -> (i32, i32) {
    %c0_i32 = arith.constant 0 : i32
    %c0_i32_0 = arith.constant 0 : i32
    %c0_i32_1 = arith.constant 0 : i32
    return %c0_i32, %c0_i32_0 : i32, i32
  }
  func.func @transform_4(%arg0: i32) -> (i32, i32) {
    %c0_i32 = arith.constant 0 : i32
    %c0_i32_0 = arith.constant 0 : i32
    %c0_i32_1 = arith.constant 0 : i32
    return %c0_i32, %c0_i32_0 : i32, i32
  }
  func.func @transform_5(%arg0: i32) -> (i32, i32) {
    %c0_i32 = arith.constant 0 : i32
    %c0_i32_0 = arith.constant 0 : i32
    %c0_i32_1 = arith.constant 0 : i32
    return %c0_i32, %c0_i32_0 : i32, i32
  }
  func.func @transform_6(%arg0: i32) -> (i32, i32) {
    %c0_i32 = arith.constant 0 : i32
    %c0_i32_0 = arith.constant 0 : i32
    %c0_i32_1 = arith.constant 0 : i32
    return %c0_i32, %c0_i32_0 : i32, i32
  }
  func.func @transform_7(%arg0: i32) -> (i32, i32) {
    %c0_i32 = arith.constant 0 : i32
    %c0_i32_0 = arith.constant 0 : i32
    return %c0_i32, %arg0 : i32, i32
  }
  func.func @transform_8(%arg0: i32) -> (i32, i32) {
    %c0_i32 = arith.constant 0 : i32
    %c0_i32_0 = arith.constant 0 : i32
    return %c0_i32, %arg0 : i32, i32
  }
}

</mosaic_0001>

<llo_original>
// kernel: tpu_custom_call.1
$region0: #{tpu_custom_call.1}
  #allocation0 [shape = 'u32[]', space=smem, size = 0x4, offset = 0x4, fixed_abs, tag = 'smem constant byte address 0x4 - core index']
  #allocation1 [shape = 'u32[144,128]{1,0:T(1,128)}', space=vmem, size = 0x12000, scoped, tag = 'internal scratch']
  %s0 = inlined_call_operand.vmem [shape: f32[4,128], index: 0, kind: input, shape index: {}]
  %s1 = inlined_call_operand.vmem [shape: f32[4,1], index: 1, kind: input, shape index: {}]
  %s2 = inlined_call_operand.vmem [shape: f32[128,4], index: 2, kind: input, shape index: {}]
  %s3 = inlined_call_operand.vmem [shape: bf16[128,128], index: 3, kind: input, shape index: {}]
  %s4 = inlined_call_operand.vmem [shape: bf16[8,128], index: 4, kind: input, shape index: {}]
  %s5 = inlined_call_operand.vmem [shape: f32[128,2], index: 5, kind: input, shape index: {}]
  %s6 = inlined_call_operand.vmem [shape: f32[8,1], index: 6, kind: input, shape index: {}]
  %s7 = inlined_call_operand.hbm [shape: f32[4,128], index: 7, kind: output, shape index: {0}]
  %s8 = inlined_call_operand.hbm [shape: f32[1,128], index: 8, kind: output, shape index: {1}]
  %9 = xla_tuple %s7, %s8
  %s10 = sld [smem:[#allocation0]]
  $region46: #{tpu_custom_call.1} parent=0
    _
  %s12 = ssub.s32 1, %s10
  %s13 = scalar_select 0, %s12, %s10
  $region1: #{tpu_custom_call.1} parent=0
    #allocation2 [shape = 'u8[2048]{0}', space=vmem, size = 0x800, scoped, tag = 'output window, operand 0, single buffered']
    #allocation3 [shape = 's32[1]{0}', space=sflag, size = 0x4, scoped, tag = 'scoped memory for tpu_custom_call.1']
    #allocation4 [shape = 'u8[512]{0}', space=vmem, size = 0x400, scoped, tag = 'output window, operand 1, single buffered']
    #allocation5 [shape = 's32[1]{0}', space=sflag, size = 0x4, scoped, tag = 'scoped memory for tpu_custom_call.1']
    %14 = vsyncpa [#allocation3], 0
    %15 = vsyncpa [#allocation5], 0
    // Predicated region
    $region2: #{tpu_custom_call.1} parent=1 // pred_check
      _
    $region3: #{tpu_custom_call.1} parent=1 // pred_check_branch
      %17 = sbr.rel (0) target = $region5
    $region4: #{tpu_custom_call.1} parent=1 // pred_region
      _
    $region5: #{tpu_custom_call.1} parent=1 // pred_fallthru
      _
    // Predicated region
    $region6: #{tpu_custom_call.1} parent=1 // pred_check
      _
    $region7: #{tpu_custom_call.1} parent=1 // pred_check_branch
      %19 = sbr.rel (0) target = $region9
    $region8: #{tpu_custom_call.1} parent=1 // pred_region
      _
    $region9: #{tpu_custom_call.1} parent=1 // pred_fallthru
      _
    // Predicated region
    $region10: #{tpu_custom_call.1} parent=1 // pred_check
      _
    $region11: #{tpu_custom_call.1} parent=1 // pred_check_branch
      %21 = sbr.rel (0) target = $region13
    $region12: #{tpu_custom_call.1} parent=1 // pred_region
      _
    $region13: #{tpu_custom_call.1} parent=1 // pred_fallthru
      _
    // Predicated region
    $region14: #{tpu_custom_call.1} parent=1 // pred_check
      _
    $region15: #{tpu_custom_call.1} parent=1 // pred_check_branch
      %23 = sbr.rel (0) target = $region17
    $region16: #{tpu_custom_call.1} parent=1 // pred_region
      _
    $region17: #{tpu_custom_call.1} parent=1 // pred_fallthru
      _
    // Predicated region
    $region18: #{tpu_custom_call.1} parent=1 // pred_check
      _
    $region19: #{tpu_custom_call.1} parent=1 // pred_check_branch
      %25 = sbr.rel (0) target = $region21
    $region20: #{tpu_custom_call.1} parent=1 // pred_region
      _
    $region21: #{tpu_custom_call.1} parent=1 // pred_fallthru
      _
    // Predicated region
    $region22: #{tpu_custom_call.1} parent=1 // pred_check
      _
    $region23: #{tpu_custom_call.1} parent=1 // pred_check_branch
      %27 = sbr.rel (0) target = $region25
    $region24: #{tpu_custom_call.1} parent=1 // pred_region
      _
    $region25: #{tpu_custom_call.1} parent=1 // pred_fallthru
      _
    // Predicated region
    $region26: #{tpu_custom_call.1} parent=1 // pred_check
      _
    $region27: #{tpu_custom_call.1} parent=1 // pred_check_branch
      %29 = sbr.rel (0) target = $region29
    $region28: #{tpu_custom_call.1} parent=1 // pred_region
      _
    $region29: #{tpu_custom_call.1} parent=1 // pred_fallthru
      _
    %v31 = vld [vmem:[%s0] sm:$0xf]
    %v32 = vld [vmem:[%s1] sm:$0xf]
    %v33 = vsub.f32 1.0, %v32
    %v34 = vld [vmem:[%s5] sm:$0xff]
    %v35 = vld [vmem:[%s5 + $0x8] sm:$0xff]
    %v36 = vld [vmem:[%s5 + $0x10] sm:$0xff]
    %v37 = vld [vmem:[%s5 + $0x18] sm:$0xff]
    %v38 = vld [vmem:[%s5 + $0x20] sm:$0xff]
    %v39 = vld [vmem:[%s5 + $0x28] sm:$0xff]
    %v40 = vld [vmem:[%s5 + $0x30] sm:$0xff]
    %v41 = vld [vmem:[%s5 + $0x38] sm:$0xff]
    %v42 = vld [vmem:[%s5 + $0x40] sm:$0xff]
    %v43 = vld [vmem:[%s5 + $0x48] sm:$0xff]
    %v44 = vld [vmem:[%s5 + $0x50] sm:$0xff]
    %v45 = vld [vmem:[%s5 + $0x58] sm:$0xff]
    %v46 = vld [vmem:[%s5 + $0x60] sm:$0xff]
    %v47 = vld [vmem:[%s5 + $0x68] sm:$0xff]
    %v48 = vld [vmem:[%s5 + $0x70] sm:$0xff]
    %v49 = vld [vmem:[%s5 + $0x78] sm:$0xff]
    %v50 = vld [vmem:[%s2] sm:$0xff]
    %v51 = vld [vmem:[%s2 + $0x8] sm:$0xff]
    %v52 = vld [vmem:[%s2 + $0x10] sm:$0xff]
    %v53 = vld [vmem:[%s2 + $0x18] sm:$0xff]
    %v54 = vld [vmem:[%s2 + $0x20] sm:$0xff]
    %v55 = vld [vmem:[%s2 + $0x28] sm:$0xff]
    %v56 = vld [vmem:[%s2 + $0x30] sm:$0xff]
    %v57 = vld [vmem:[%s2 + $0x38] sm:$0xff]
    %v58 = vld [vmem:[%s2 + $0x40] sm:$0xff]
    %v59 = vld [vmem:[%s2 + $0x48] sm:$0xff]
    %v60 = vld [vmem:[%s2 + $0x50] sm:$0xff]
    %v61 = vld [vmem:[%s2 + $0x58] sm:$0xff]
    %v62 = vld [vmem:[%s2 + $0x60] sm:$0xff]
    %v63 = vld [vmem:[%s2 + $0x68] sm:$0xff]
    %v64 = vld [vmem:[%s2 + $0x70] sm:$0xff]
    %v65 = vld [vmem:[%s2 + $0x78] sm:$0xff]
    %67 = vset.pattern.permute.xlu0 0
    %68 = vperm.xlu0 %67, %v34
    %v69 = vpop.permute.xlu0 %68
    %72 = vset.pattern.permute.xlu0 0
    %73 = vperm.xlu0 %72, %v35
    %v74 = vpop.permute.xlu0 %73
    %77 = vset.pattern.permute.xlu0 0
    %78 = vperm.xlu0 %77, %v36
    %v79 = vpop.permute.xlu0 %78
    %82 = vset.pattern.permute.xlu0 0
    %83 = vperm.xlu0 %82, %v37
    %v84 = vpop.permute.xlu0 %83
    %87 = vset.pattern.permute.xlu0 0
    %88 = vperm.xlu0 %87, %v38
    %v89 = vpop.permute.xlu0 %88
    %92 = vset.pattern.permute.xlu0 0
    %93 = vperm.xlu0 %92, %v39
    %v94 = vpop.permute.xlu0 %93
    %97 = vset.pattern.permute.xlu0 0
    %98 = vperm.xlu0 %97, %v40
    %v99 = vpop.permute.xlu0 %98
    %102 = vset.pattern.permute.xlu0 0
    %103 = vperm.xlu0 %102, %v41
    %v104 = vpop.permute.xlu0 %103
    %107 = vset.pattern.permute.xlu0 0
    %108 = vperm.xlu0 %107, %v42
    %v109 = vpop.permute.xlu0 %108
    %112 = vset.pattern.permute.xlu0 0
    %113 = vperm.xlu0 %112, %v43
    %v114 = vpop.permute.xlu0 %113
    %117 = vset.pattern.permute.xlu0 0
    %118 = vperm.xlu0 %117, %v44
    %v119 = vpop.permute.xlu0 %118
    %122 = vset.pattern.permute.xlu0 0
    %123 = vperm.xlu0 %122, %v45
    %v124 = vpop.permute.xlu0 %123
    %127 = vset.pattern.permute.xlu0 0
    %128 = vperm.xlu0 %127, %v46
    %v129 = vpop.permute.xlu0 %128
    %132 = vset.pattern.permute.xlu0 0
    %133 = vperm.xlu0 %132, %v47
    %v134 = vpop.permute.xlu0 %133
    %137 = vset.pattern.permute.xlu0 0
    %138 = vperm.xlu0 %137, %v48
    %v139 = vpop.permute.xlu0 %138
    %142 = vset.pattern.permute.xlu0 0
    %143 = vperm.xlu0 %142, %v49
    %v144 = vpop.permute.xlu0 %143
    %vm146 = vcmask 31744
    %v148 = vsel %vm146, %v50, 0
    %v151 = vsel %vm146, %v51, 0
    %v154 = vsel %vm146, %v52, 0
    %v157 = vsel %vm146, %v53, 0
    %v160 = vsel %vm146, %v54, 0
    %v163 = vsel %vm146, %v55, 0
    %v166 = vsel %vm146, %v56, 0
    %v169 = vsel %vm146, %v57, 0
    %v172 = vsel %vm146, %v58, 0
    %v175 = vsel %vm146, %v59, 0
    %v178 = vsel %vm146, %v60, 0
    %v181 = vsel %vm146, %v61, 0
    %v184 = vsel %vm146, %v62, 0
    %v187 = vsel %vm146, %v63, 0
    %v190 = vsel %vm146, %v64, 0
    %v193 = vsel %vm146, %v65, 0
    %vm195 = vcmask 1043456
    %v197 = vsel %vm195, %v31, 0
    %199 = vmatprep.subr.mxu0 0.0
    %200 = vmatpush1.msra.mxu0 0.0
    %201 = vmatprep.subr.mxu0 0.0
    %202 = vmatpush1.msra.mxu0 0.0
    %203 = vmatprep.subr.mxu0 0.0
    %204 = vmatpush1.msra.mxu0 0.0
    %205 = vmatprep.subr.mxu0 0.0
    %206 = vmatpush1.msra.mxu0 0.0
    %207 = vmatprep.subr.mxu0 0.0
    %208 = vmatpush1.msra.mxu0 0.0
    %209 = vmatprep.subr.mxu0 0.0
    %210 = vmatpush1.msra.mxu0 0.0
    %211 = vmatprep.subr.mxu0 0.0
    %212 = vmatpush1.msra.mxu0 0.0
    %213 = vmatprep.subr.mxu0 0.0
    %214 = vmatpush1.msra.mxu0 0.0
    %215 = vmatprep.subr.mxu0 0.0
    %216 = vmatpush1.msra.mxu0 0.0
    %217 = vmatprep.subr.mxu0 0.0
    %218 = vmatpush1.msra.mxu0 0.0
    %219 = vmatprep.subr.mxu0 0.0
    %220 = vmatpush1.msra.mxu0 0.0
    %221 = vmatprep.subr.mxu0 0.0
    %222 = vmatpush1.msra.mxu0 0.0
    %223 = vmatprep.subr.mxu0 0.0
    %224 = vmatpush1.msra.mxu0 0.0
    %225 = vmatprep.subr.mxu0 0.0
    %226 = vmatpush1.msra.mxu0 0.0
    %227 = vmatprep.subr.mxu0 0.0
    %228 = vmatpush1.msra.mxu0 0.0
    %229 = vmatprep.subr.mxu0 0.0
    %230 = vmatpush1.msra.mxu0 %v197
    %231 = vmatprep.subr.mxu0 0.0
    %232 = vmatpush2.msra.mxu0 0.0
    %233 = vmatprep.subr.mxu0 0.0
    %234 = vmatpush2.msra.mxu0 0.0
    %235 = vmatprep.subr.mxu0 0.0
    %236 = vmatpush2.msra.mxu0 0.0
    %237 = vmatprep.subr.mxu0 0.0
    %238 = vmatpush2.msra.mxu0 0.0
    %239 = vmatprep.subr.mxu0 0.0
    %240 = vmatpush2.msra.mxu0 0.0
    %241 = vmatprep.subr.mxu0 0.0
    %242 = vmatpush2.msra.mxu0 0.0
    %243 = vmatprep.subr.mxu0 0.0
    %244 = vmatpush2.msra.mxu0 0.0
    %245 = vmatprep.subr.mxu0 0.0
    %246 = vmatpush2.msra.mxu0 0.0
    %247 = vmatprep.subr.mxu0 0.0
    %248 = vmatpush2.msra.mxu0 0.0
    %249 = vmatprep.subr.mxu0 0.0
    %250 = vmatpush2.msra.mxu0 0.0
    %251 = vmatprep.subr.mxu0 0.0
    %252 = vmatpush2.msra.mxu0 0.0
    %253 = vmatprep.subr.mxu0 0.0
    %254 = vmatpush2.msra.mxu0 0.0
    %255 = vmatprep.subr.mxu0 0.0
    %256 = vmatpush2.msra.mxu0 0.0
    %257 = vmatprep.subr.mxu0 0.0
    %258 = vmatpush2.msra.mxu0 0.0
    %259 = vmatprep.subr.mxu0 0.0
    %260 = vmatpush2.msra.mxu0 0.0
    %261 = vmatprep.subr.mxu0 0.0
    %262 = vmatpush2.msra.mxu0 0.0
    %263 = vmatprep.mubr.f32.mxu0 0.0
    %264 = vmatmul.mubr.f32.gmra.mxu0 %v148
    %v265 = vpop.f32.mrf.mxu0
    %v266 = vadd.f32 %v69, %v265
    %v267 = vpop.f32.mrf.mxu0
    %268 = vmatprep.mubr.f32.mxu0 0.0
    %269 = vmatmul.mubr.f32.gmra.mxu0 %v151
    %v270 = vpop.f32.mrf.mxu0
    %v271 = vadd.f32 %v74, %v270
    %v272 = vpop.f32.mrf.mxu0
    %273 = vmatprep.mubr.f32.mxu0 0.0
    %274 = vmatmul.mubr.f32.gmra.mxu0 %v154
    %v275 = vpop.f32.mrf.mxu0
    %v276 = vadd.f32 %v79, %v275
    %v277 = vpop.f32.mrf.mxu0
    %278 = vmatprep.mubr.f32.mxu0 0.0
    %279 = vmatmul.mubr.f32.gmra.mxu0 %v157
    %v280 = vpop.f32.mrf.mxu0
    %v281 = vadd.f32 %v84, %v280
    %v282 = vpop.f32.mrf.mxu0
    %283 = vmatprep.mubr.f32.mxu0 0.0
    %284 = vmatmul.mubr.f32.gmra.mxu0 %v160
    %v285 = vpop.f32.mrf.mxu0
    %v286 = vadd.f32 %v89, %v285
    %v287 = vpop.f32.mrf.mxu0
    %288 = vmatprep.mubr.f32.mxu0 0.0
    %289 = vmatmul.mubr.f32.gmra.mxu0 %v163
    %v290 = vpop.f32.mrf.mxu0
    %v291 = vadd.f32 %v94, %v290
    %v292 = vpop.f32.mrf.mxu0
    %293 = vmatprep.mubr.f32.mxu0 0.0
    %294 = vmatmul.mubr.f32.gmra.mxu0 %v166
    %v295 = vpop.f32.mrf.mxu0
    %v296 = vadd.f32 %v99, %v295
    %v297 = vpop.f32.mrf.mxu0
    %298 = vmatprep.mubr.f32.mxu0 0.0
    %299 = vmatmul.mubr.f32.gmra.mxu0 %v169
    %v300 = vpop.f32.mrf.mxu0
    %v301 = vadd.f32 %v104, %v300
    %v302 = vpop.f32.mrf.mxu0
    %303 = vmatprep.mubr.f32.mxu0 0.0
    %304 = vmatmul.mubr.f32.gmra.mxu0 %v172
    %v305 = vpop.f32.mrf.mxu0
    %v306 = vadd.f32 %v109, %v305
    %v307 = vpop.f32.mrf.mxu0
    %308 = vmatprep.mubr.f32.mxu0 0.0
    %309 = vmatmul.mubr.f32.gmra.mxu0 %v175
    %v310 = vpop.f32.mrf.mxu0
    %v311 = vadd.f32 %v114, %v310
    %v312 = vpop.f32.mrf.mxu0
    %313 = vmatprep.mubr.f32.mxu0 0.0
    %314 = vmatmul.mubr.f32.gmra.mxu0 %v178
    %v315 = vpop.f32.mrf.mxu0
    %v316 = vadd.f32 %v119, %v315
    %v317 = vpop.f32.mrf.mxu0
    %318 = vmatprep.mubr.f32.mxu0 0.0
    %319 = vmatmul.mubr.f32.gmra.mxu0 %v181
    %v320 = vpop.f32.mrf.mxu0
    %v321 = vadd.f32 %v124, %v320
    %v322 = vpop.f32.mrf.mxu0
    %323 = vmatprep.mubr.f32.mxu0 0.0
    %324 = vmatmul.mubr.f32.gmra.mxu0 %v184
    %v325 = vpop.f32.mrf.mxu0
    %v326 = vadd.f32 %v129, %v325
    %v327 = vpop.f32.mrf.mxu0
    %328 = vmatprep.mubr.f32.mxu0 0.0
    %329 = vmatmul.mubr.f32.gmra.mxu0 %v187
    %v330 = vpop.f32.mrf.mxu0
    %v331 = vadd.f32 %v134, %v330
    %v332 = vpop.f32.mrf.mxu0
    %333 = vmatprep.mubr.f32.mxu0 0.0
    %334 = vmatmul.mubr.f32.gmra.mxu0 %v190
    %v335 = vpop.f32.mrf.mxu0
    %v336 = vadd.f32 %v139, %v335
    %v337 = vpop.f32.mrf.mxu0
    %338 = vmatprep.mubr.f32.mxu0 0.0
    %339 = vmatmul.mubr.f32.gmra.mxu0 %v193
    %v340 = vpop.f32.mrf.mxu0
    %v341 = vadd.f32 %v144, %v340
    %v342 = vpop.f32.mrf.mxu0
    %343 = vdwg.mxu0
    %v344 = vmax.f32 %v266, 0.0
    %v345 = vmax.f32 %v271, 0.0
    %v346 = vmax.f32 %v276, 0.0
    %v347 = vmax.f32 %v281, 0.0
    %v348 = vmax.f32 %v286, 0.0
    %v349 = vmax.f32 %v291, 0.0
    %v350 = vmax.f32 %v296, 0.0
    %v351 = vmax.f32 %v301, 0.0
    %v352 = vmax.f32 %v306, 0.0
    %v353 = vmax.f32 %v311, 0.0
    %v354 = vmax.f32 %v316, 0.0
    %v355 = vmax.f32 %v321, 0.0
    %v356 = vmax.f32 %v326, 0.0
    %v357 = vmax.f32 %v331, 0.0
    %v358 = vmax.f32 %v336, 0.0
    %v359 = vmax.f32 %v341, 0.0
    %v360 = vld [vmem:[%s3] sm:$0xf]
    %v361 = vld [vmem:[%s3 + $0x4] sm:$0xf]
    %v362 = vld [vmem:[%s3 + $0x8] sm:$0xf]
    %v363 = vld [vmem:[%s3 + $0xc] sm:$0xf]
    %v364 = vld [vmem:[%s3 + $0x10] sm:$0xf]
    %v365 = vld [vmem:[%s3 + $0x14] sm:$0xf]
    %v366 = vld [vmem:[%s3 + $0x18] sm:$0xf]
    %v367 = vld [vmem:[%s3 + $0x1c] sm:$0xf]
    %v368 = vld [vmem:[%s3 + $0x20] sm:$0xf]
    %v369 = vld [vmem:[%s3 + $0x24] sm:$0xf]
    %v370 = vld [vmem:[%s3 + $0x28] sm:$0xf]
    %v371 = vld [vmem:[%s3 + $0x2c] sm:$0xf]
    %v372 = vld [vmem:[%s3 + $0x30] sm:$0xf]
    %v373 = vld [vmem:[%s3 + $0x34] sm:$0xf]
    %v374 = vld [vmem:[%s3 + $0x38] sm:$0xf]
    %v375 = vld [vmem:[%s3 + $0x3c] sm:$0xf]
    %v376 = vpack.c.bf16 %v345, %v344
    %v377 = vpack.c.bf16 %v347, %v346
    %v378 = vpack.c.bf16 %v349, %v348
    %v379 = vpack.c.bf16 %v351, %v350
    %v380 = vpack.c.bf16 %v353, %v352
    %v381 = vpack.c.bf16 %v355, %v354
    %v382 = vpack.c.bf16 %v357, %v356
    %v383 = vpack.c.bf16 %v359, %v358
    %384 = vset.pattern.permute.xlu0 1
    %385 = vperm.xlu0 %384, %v34
    %v386 = vpop.permute.xlu0 %385
    %388 = vset.pattern.permute.xlu0 1
    %389 = vperm.xlu0 %388, %v35
    %v390 = vpop.permute.xlu0 %389
    %392 = vset.pattern.permute.xlu0 1
    %393 = vperm.xlu0 %392, %v36
    %v394 = vpop.permute.xlu0 %393
    %396 = vset.pattern.permute.xlu0 1
    %397 = vperm.xlu0 %396, %v37
    %v398 = vpop.permute.xlu0 %397
    %400 = vset.pattern.permute.xlu0 1
    %401 = vperm.xlu0 %400, %v38
    %v402 = vpop.permute.xlu0 %401
    %404 = vset.pattern.permute.xlu0 1
    %405 = vperm.xlu0 %404, %v39
    %v406 = vpop.permute.xlu0 %405
    %408 = vset.pattern.permute.xlu0 1
    %409 = vperm.xlu0 %408, %v40
    %v410 = vpop.permute.xlu0 %409
    %412 = vset.pattern.permute.xlu0 1
    %413 = vperm.xlu0 %412, %v41
    %v414 = vpop.permute.xlu0 %413
    %416 = vset.pattern.permute.xlu0 1
    %417 = vperm.xlu0 %416, %v42
    %v418 = vpop.permute.xlu0 %417
    %420 = vset.pattern.permute.xlu0 1
    %421 = vperm.xlu0 %420, %v43
    %v422 = vpop.permute.xlu0 %421
    %424 = vset.pattern.permute.xlu0 1
    %425 = vperm.xlu0 %424, %v44
    %v426 = vpop.permute.xlu0 %425
    %428 = vset.pattern.permute.xlu0 1
    %429 = vperm.xlu0 %428, %v45
    %v430 = vpop.permute.xlu0 %429
    %432 = vset.pattern.permute.xlu0 1
    %433 = vperm.xlu0 %432, %v46
    %v434 = vpop.permute.xlu0 %433
    %436 = vset.pattern.permute.xlu0 1
    %437 = vperm.xlu0 %436, %v47
    %v438 = vpop.permute.xlu0 %437
    %440 = vset.pattern.permute.xlu0 1
    %441 = vperm.xlu0 %440, %v48
    %v442 = vpop.permute.xlu0 %441
    %444 = vset.pattern.permute.xlu0 1
    %445 = vperm.xlu0 %444, %v49
    %v446 = vpop.permute.xlu0 %445
    %v464 = vunpack.c.l.b16 %v360
    %v465 = vunpack.c.l.b16 %v361
    %v466 = vunpack.c.l.b16 %v362
    %v467 = vunpack.c.l.b16 %v363
    %v468 = vunpack.c.l.b16 %v364
    %v469 = vunpack.c.l.b16 %v365
    %v470 = vunpack.c.l.b16 %v366
    %v471 = vunpack.c.l.b16 %v367
    %v472 = vunpack.c.l.b16 %v368
    %v473 = vunpack.c.l.b16 %v369
    %v474 = vunpack.c.l.b16 %v370
    %v475 = vunpack.c.l.b16 %v371
    %v476 = vunpack.c.l.b16 %v372
    %v477 = vunpack.c.l.b16 %v373
    %v478 = vunpack.c.l.b16 %v374
    %v479 = vunpack.c.l.b16 %v375
    %v480 = vpack.c.b16 %v465, %v464
    %v481 = vpack.c.b16 %v467, %v466
    %v482 = vpack.c.b16 %v469, %v468
    %v483 = vpack.c.b16 %v471, %v470
    %v484 = vpack.c.b16 %v473, %v472
    %v485 = vpack.c.b16 %v475, %v474
    %v486 = vpack.c.b16 %v477, %v476
    %v487 = vpack.c.b16 %v479, %v478
    %496 = vmatprep.subr.bf16.mxu0 0
    %497 = vmatpush1.bf16.msra.mxu0 %v383
    %498 = vmatprep.subr.bf16.mxu0 0
    %499 = vmatpush1.bf16.msra.mxu0 %v382
    %500 = vmatprep.subr.bf16.mxu0 0
    %501 = vmatpush1.bf16.msra.mxu0 %v381
    %502 = vmatprep.subr.bf16.mxu0 0
    %503 = vmatpush1.bf16.msra.mxu0 %v380
    %504 = vmatprep.subr.bf16.mxu0 0
    %505 = vmatpush1.bf16.msra.mxu0 %v379
    %506 = vmatprep.subr.bf16.mxu0 0
    %507 = vmatpush1.bf16.msra.mxu0 %v378
    %508 = vmatprep.subr.bf16.mxu0 0
    %509 = vmatpush1.bf16.msra.mxu0 %v377
    %510 = vmatprep.subr.bf16.mxu0 0
    %511 = vmatpush1.bf16.msra.mxu0 %v376
    %512 = vmatprep.subr.bf16.mxu0 0
    %513 = vmatpush2.bf16.msra.mxu0 0
    %514 = vmatprep.subr.bf16.mxu0 0
    %515 = vmatpush2.bf16.msra.mxu0 0
    %516 = vmatprep.subr.bf16.mxu0 0
    %517 = vmatpush2.bf16.msra.mxu0 0
    %518 = vmatprep.subr.bf16.mxu0 0
    %519 = vmatpush2.bf16.msra.mxu0 0
    %520 = vmatprep.subr.bf16.mxu0 0
    %521 = vmatpush2.bf16.msra.mxu0 0
    %522 = vmatprep.subr.bf16.mxu0 0
    %523 = vmatpush2.bf16.msra.mxu0 0
    %524 = vmatprep.subr.bf16.mxu0 0
    %525 = vmatpush2.bf16.msra.mxu0 0
    %526 = vmatprep.subr.bf16.mxu0 0
    %527 = vmatpush2.bf16.msra.mxu0 0
    %528 = vmatprep.mubr.bf16.mxu0 0
    %529 = vmatmul.mubr.bf16.gmra.mxu0 %v480
    %v530 = vpop.f32.mrf.mxu0
    %v531 = vadd.f32 %v386, %v530
    %v532 = vpop.f32.mrf.mxu0
    %v533 = vpop.f32.mrf.mxu0
    %v534 = vadd.f32 %v390, %v533
    %v535 = vpop.f32.mrf.mxu0
    %536 = vmatprep.mubr.bf16.mxu0 0
    %537 = vmatmul.mubr.bf16.gmra.mxu0 %v481
    %v538 = vpop.f32.mrf.mxu0
    %v539 = vadd.f32 %v394, %v538
    %v540 = vpop.f32.mrf.mxu0
    %v541 = vpop.f32.mrf.mxu0
    %v542 = vadd.f32 %v398, %v541
    %v543 = vpop.f32.mrf.mxu0
    %544 = vmatprep.mubr.bf16.mxu0 0
    %545 = vmatmul.mubr.bf16.gmra.mxu0 %v482
    %v546 = vpop.f32.mrf.mxu0
    %v547 = vadd.f32 %v402, %v546
    %v548 = vpop.f32.mrf.mxu0
    %v549 = vpop.f32.mrf.mxu0
    %v550 = vadd.f32 %v406, %v549
    %v551 = vpop.f32.mrf.mxu0
    %552 = vmatprep.mubr.bf16.mxu0 0
    %553 = vmatmul.mubr.bf16.gmra.mxu0 %v483
    %v554 = vpop.f32.mrf.mxu0
    %v555 = vadd.f32 %v410, %v554
    %v556 = vpop.f32.mrf.mxu0
    %v557 = vpop.f32.mrf.mxu0
    %v558 = vadd.f32 %v414, %v557
    %v559 = vpop.f32.mrf.mxu0
    %560 = vmatprep.mubr.bf16.mxu0 0
    %561 = vmatmul.mubr.bf16.gmra.mxu0 %v484
    %v562 = vpop.f32.mrf.mxu0
    %v563 = vadd.f32 %v418, %v562
    %v564 = vpop.f32.mrf.mxu0
    %v565 = vpop.f32.mrf.mxu0
    %v566 = vadd.f32 %v422, %v565
    %v567 = vpop.f32.mrf.mxu0
    %568 = vmatprep.mubr.bf16.mxu0 0
    %569 = vmatmul.mubr.bf16.gmra.mxu0 %v485
    %v570 = vpop.f32.mrf.mxu0
    %v571 = vadd.f32 %v426, %v570
    %v572 = vpop.f32.mrf.mxu0
    %v573 = vpop.f32.mrf.mxu0
    %v574 = vadd.f32 %v430, %v573
    %v575 = vpop.f32.mrf.mxu0
    %576 = vmatprep.mubr.bf16.mxu0 0
    %577 = vmatmul.mubr.bf16.gmra.mxu0 %v486
    %v578 = vpop.f32.mrf.mxu0
    %v579 = vadd.f32 %v434, %v578
    %v580 = vpop.f32.mrf.mxu0
    %v581 = vpop.f32.mrf.mxu0
    %v582 = vadd.f32 %v438, %v581
    %v583 = vpop.f32.mrf.mxu0
    %584 = vmatprep.mubr.bf16.mxu0 0
    %585 = vmatmul.mubr.bf16.gmra.mxu0 %v487
    %v586 = vpop.f32.mrf.mxu0
    %v587 = vadd.f32 %v442, %v586
    %v588 = vpop.f32.mrf.mxu0
    %v589 = vpop.f32.mrf.mxu0
    %v590 = vadd.f32 %v446, %v589
    %v591 = vpop.f32.mrf.mxu0
    %592 = vdwg.mxu0
    %v593 = vmax.f32 %v531, 0.0
    %v594 = vmax.f32 %v534, 0.0
    %v595 = vmax.f32 %v539, 0.0
    %v596 = vmax.f32 %v542, 0.0
    %v597 = vmax.f32 %v547, 0.0
    %v598 = vmax.f32 %v550, 0.0
    %v599 = vmax.f32 %v555, 0.0
    %v600 = vmax.f32 %v558, 0.0
    %v601 = vmax.f32 %v563, 0.0
    %v602 = vmax.f32 %v566, 0.0
    %v603 = vmax.f32 %v571, 0.0
    %v604 = vmax.f32 %v574, 0.0
    %v605 = vmax.f32 %v579, 0.0
    %v606 = vmax.f32 %v582, 0.0
    %v607 = vmax.f32 %v587, 0.0
    %v608 = vmax.f32 %v590, 0.0
    %v609 = vld [vmem:[%s4] sm:$0xf]
    %v610 = vpack.c.bf16 %v594, %v593
    %v611 = vpack.c.bf16 %v596, %v595
    %v612 = vpack.c.bf16 %v598, %v597
    %v613 = vpack.c.bf16 %v600, %v599
    %v614 = vpack.c.bf16 %v602, %v601
    %v615 = vpack.c.bf16 %v604, %v603
    %v616 = vpack.c.bf16 %v606, %v605
    %v617 = vpack.c.bf16 %v608, %v607
    %v618 = vld [vmem:[%s6] sm:$0xff]
    %620 = vset.pattern.permute.xlu0 0
    %621 = vperm.xlu0 %620, %v618
    %v622 = vpop.permute.xlu0 %621
    %624 = vmatprep.subr.bf16.mxu0 0
    %625 = vmatpush1.bf16.msra.mxu0 %v617
    %626 = vmatprep.subr.bf16.mxu0 0
    %627 = vmatpush1.bf16.msra.mxu0 %v616
    %628 = vmatprep.subr.bf16.mxu0 0
    %629 = vmatpush1.bf16.msra.mxu0 %v615
    %630 = vmatprep.subr.bf16.mxu0 0
    %631 = vmatpush1.bf16.msra.mxu0 %v614
    %632 = vmatprep.subr.bf16.mxu0 0
    %633 = vmatpush1.bf16.msra.mxu0 %v613
    %634 = vmatprep.subr.bf16.mxu0 0
    %635 = vmatpush1.bf16.msra.mxu0 %v612
    %636 = vmatprep.subr.bf16.mxu0 0
    %637 = vmatpush1.bf16.msra.mxu0 %v611
    %638 = vmatprep.subr.bf16.mxu0 0
    %639 = vmatpush1.bf16.msra.mxu0 %v610
    %640 = vmatprep.subr.bf16.mxu0 0
    %641 = vmatpush2.bf16.msra.mxu0 0
    %642 = vmatprep.subr.bf16.mxu0 0
    %643 = vmatpush2.bf16.msra.mxu0 0
    %644 = vmatprep.subr.bf16.mxu0 0
    %645 = vmatpush2.bf16.msra.mxu0 0
    %646 = vmatprep.subr.bf16.mxu0 0
    %647 = vmatpush2.bf16.msra.mxu0 0
    %648 = vmatprep.subr.bf16.mxu0 0
    %649 = vmatpush2.bf16.msra.mxu0 0
    %650 = vmatprep.subr.bf16.mxu0 0
    %651 = vmatpush2.bf16.msra.mxu0 0
    %652 = vmatprep.subr.bf16.mxu0 0
    %653 = vmatpush2.bf16.msra.mxu0 0
    %654 = vmatprep.subr.bf16.mxu0 0
    %655 = vmatpush2.bf16.msra.mxu0 0
    %656 = vmatprep.mubr.bf16.mxu0 0
    %657 = vmatmul.mubr.bf16.gmra.mxu0 %v609
    %v658 = vpop.f32.mrf.mxu0
    %v659 = vadd.f32 %v622, %v658
    %v660 = vpop.f32.mrf.mxu0
    %v661 = vpop.f32.mrf.mxu0
    %v662 = vpop.f32.mrf.mxu0
    %663 = vdwg.mxu0
    %665 = vset.pattern.permute.xlu0 0
    %666 = vperm.xlu0 %665, %v32
    %v667 = vpop.permute.xlu0 %666
    %v669 = vmul.f32 %v31, %v667
    %v670 = vmul.f32 %v659, 1.442695
    %v671 = vpow.pop %v670
    %v672 = vmul.f32 %v31, %v671
    %v674 = vrot.slane %v659, 4
    %v676 = vadd.f32 %v672, %v674
    %678 = vset.pattern.permute.xlu0 0
    %679 = vperm.xlu0 %678, %v33
    %v680 = vpop.permute.xlu0 %679
    %v682 = vmul.f32 %v680, %v676
    %v683 = vadd.f32 %v669, %v682
    %684 = vst [vmem:[#allocation2] sm:$0xf] %v683
    %v685 = vmul.f32 %v680, %v659
    %v686 = vsel %vm195, %v685, 0.0
    %v687 = vrot.slane %v686, 4
    %v688 = vadd.f32 %v686, %v687
    %v689 = vrot.slane %v688, 2
    %v690 = vadd.f32 %v688, %v689
    %v691 = vrot.slane %v690, 1
    %v692 = vadd.f32 %v690, %v691
    %693 = vst [vmem:[#allocation4] sm:$0x1] %v692
    // Predicated region
    $region30: #{tpu_custom_call.1} parent=1 // pred_check
      _
    $region31: #{tpu_custom_call.1} parent=1 // pred_check_branch
      %695 = sbr.rel (0) target = $region33
    $region32: #{tpu_custom_call.1} parent=1 // pred_region
      %s697 = ssub.s32 64, 64
      %698 = vsyncadd [#allocation3], %s697
      %s700 = sshll.u32 [#allocation2], 4
      %s701 = int_to_ptr.vmem [resolvable:$true] %s700
      %703 = dma.vmem_to_hbm [thread:$0]  %s701, 64, %s7, [#allocation3]
    $region33: #{tpu_custom_call.1} parent=1 // pred_fallthru
      _
    // Predicated region
    $region34: #{tpu_custom_call.1} parent=1 // pred_check
      _
    $region35: #{tpu_custom_call.1} parent=1 // pred_check_branch
      %705 = sbr.rel (0) target = $region37
    $region36: #{tpu_custom_call.1} parent=1 // pred_region
      %s707 = ssub.s32 16, 16
      %708 = vsyncadd [#allocation5], %s707
      %s710 = sshll.u32 [#allocation4], 4
      %s711 = int_to_ptr.vmem [resolvable:$true] %s710
      %713 = dma.vmem_to_hbm [thread:$0]  %s711, 16, %s8, [#allocation5]
    $region37: #{tpu_custom_call.1} parent=1 // pred_fallthru
      _
    // Predicated region
    $region38: #{tpu_custom_call.1} parent=1 // pred_check
      _
    $region39: #{tpu_custom_call.1} parent=1 // pred_check_branch
      %715 = sbr.rel (0) target = $region41
    $region40: #{tpu_custom_call.1} parent=1 // pred_region
      %716 = dma.done [#allocation3], 64
    $region41: #{tpu_custom_call.1} parent=1 // pred_fallthru
      _
    // Predicated region
    $region42: #{tpu_custom_call.1} parent=1 // pred_check
      _
    $region43: #{tpu_custom_call.1} parent=1 // pred_check_branch
      %718 = sbr.rel (0) target = $region45
    $region44: #{tpu_custom_call.1} parent=1 // pred_region
      %719 = dma.done [#allocation5], 16
    $region45: #{tpu_custom_call.1} parent=1 // pred_fallthru
      _
    %720 = vsyncpa [#allocation3], 1
    %721 = vsyncpa [#allocation5], 1

</llo_original>
